<compile_context>
chip_gen: v5e
topology: v5e:2x2
jax: 0.10.0
libtpu: 0.0.40
codegen_flags: <defaults>
</compile_context>

<pallas_src>
import jax
import jax.numpy as jnp
from jax.experimental import pallas as pl
from jax.experimental.pallas import tpu as pltpu

# Constant from the original repo (virtual bonds are tagged with -1).
VIRTUAL_BOND_FEATURE_PLACEHOLDER = -1


def _round_up(x, m):
    return (x + m - 1) // m * m


def _vmem_capacity_bytes():
    """Generation-aware VMEM capacity (fallback: conservative v7x per-TC)."""
    try:
        return int(pltpu.get_tpu_info().vmem_capacity_bytes)
    except Exception:
        return 64 * 1024 * 1024


def bond_embedding_kernel(edge_ref, ind_ref, w_ref, b_ref, vemb_ref, out_ref):
    # edge_ref : (tn, d_bond)   stream dtype (f32 or bf16)
    # ind_ref  : (tn, 1)        int32   (== -1 => virtual bond)
    # w_ref    : (d_bond, d_g)  stream dtype (nn.Linear weight, pre-transposed)
    # b_ref    : (1, d_g)       f32
    # vemb_ref : (1, d_g)       f32     (virtual bond embedding row)
    # out_ref  : (tn, d_g)      out dtype
    h = jnp.dot(edge_ref[...], w_ref[...], preferred_element_type=jnp.float32)
    h = h + b_ref[...]                                        # broadcast bias
    is_virtual = ind_ref[...] == VIRTUAL_BOND_FEATURE_PLACEHOLDER   # (tn, 1)
    out = jnp.where(is_virtual, vemb_ref[...], h)             # row-wise overwrite
    # TODO(synk): nn.Dropout omitted (eval-mode identity); a training-mode
    # version would use pltpu.prng_seed + pltpu.stateful_bernoulli here.
    # NOTE: padded rows of a boundary block hold garbage here; their stores are
    # masked by Pallas, so they never reach HBM. Never read them back.
    out_ref[...] = out.astype(out_ref.dtype)


def bond_embedding(edge_feats, indicators, w_t, bias, virtual_emb, *,
                   tn=8192, stream_dtype=None, out_dtype=None):
    """BondEmbedding forward.

    edge_feats : [N, d_bond] float,  indicators : [N] int
    w_t        : [d_bond, d_g]  (nn.Linear weight pre-transposed)
    bias, virtual_emb : [d_g]
    returns    : [N, d_g]
    tn: requested row tile (auto-capped by VMEM budget and grid occupancy).
    stream_dtype/out_dtype: set to jnp.bfloat16 for bandwidth-bound inference.
    """
    N, d_bond = edge_feats.shape
    d_g = w_t.shape[1]
    out_dtype = out_dtype or edge_feats.dtype
    stream_dtype = stream_dtype or edge_feats.dtype

    if N == 0:  # degenerate case guard
        return jnp.zeros((0, d_g), out_dtype)

    # --- small wrapper-side casts/reshapes (identity/metadata when possible) ---
    edge = edge_feats.astype(stream_dtype)
    w = w_t.astype(stream_dtype)
    b = bias.astype(jnp.float32).reshape(1, d_g)
    v = virtual_emb.astype(jnp.float32).reshape(1, d_g)
    ind = indicators.astype(jnp.int32).reshape(N, 1)

    stream_bytes = jnp.dtype(stream_dtype).itemsize
    out_bytes = jnp.dtype(out_dtype).itemsize

    # --- row-tile selection (generation-aware VMEM budget) ---
    # Per-row VMEM (double-buffered): lane-padded edge tile + int32 indicator
    # tile + output tile (lanes pad to >=128 in VMEM even if d_g < 128).
    vmem_usable = _vmem_capacity_bytes() * 3 // 4
    lane_dg = max(_round_up(d_g, 128), 128)
    per_row = 2 * (128 * stream_bytes + 128 * 4 + lane_dg * out_bytes)
    tn_vmem = max(8, (vmem_usable // per_row) // 8 * 8)
    tn = min(tn, tn_vmem)
    if N > 8:
        # Keep >= 2 grid steps so both v7x TensorCores get work; multiple of 8
        # keeps the (8,128) sublane rule happy for partial tiles.
        tn = max(8, min(tn, _round_up(pl.cdiv(N, 2), 8)))
    else:
        tn = N  # full-dim block is always legal for tiny N

    grid = (pl.cdiv(N, tn),)

    # Actual working set (+ resident weight/bias/vemb) stays well under budget;
    # expose the budget to Mosaic explicitly.
    vmem_limit = int(vmem_usable)

    cost = pl.CostEstimate(
        flops=2 * N * d_bond * d_g,
        transcendentals=0,
        bytes_accessed=(N * (d_bond * stream_bytes + 4 + d_g * out_bytes)
                        + d_bond * d_g * stream_bytes + 2 * d_g * 4),
    )

    out = pl.pallas_call(
        bond_embedding_kernel,
        out_shape=jax.ShapeDtypeStruct((N, d_g), out_dtype),
        grid_spec=pltpu.PrefetchScalarGridSpec(
            num_scalar_prefetch=0,
            grid=grid,
            in_specs=[
                pl.BlockSpec((tn, d_bond), lambda i: (i, 0)),   # edge rows
                pl.BlockSpec((tn, 1), lambda i: (i, 0)),        # indicators
                pl.BlockSpec((d_bond, d_g), lambda i: (0, 0)),  # weight (resident)
                pl.BlockSpec((1, d_g), lambda i: (0, 0)),       # bias
                pl.BlockSpec((1, d_g), lambda i: (0, 0)),       # virtual emb
            ],
            out_specs=pl.BlockSpec((tn, d_g), lambda i: (i, 0)),
        ),
        compiler_params=pltpu.CompilerParams(
            dimension_semantics=("parallel",),   # v7x: shard grid over both TCs
            vmem_limit_bytes=vmem_limit),
        cost_estimate=cost,
    )(edge, ind, w, b, v)

    return out


if __name__ == "__main__":
    # Small, module-consistent shapes.
    N = 16            # number of edges
    d_bond_feats = 8
    d_g_feats = 32

    key = jax.random.PRNGKey(0)
    k_edge, k_w, k_b, k_v, k_ind = jax.random.split(key, 5)

    edge_feats = jax.random.normal(k_edge, (N, d_bond_feats), dtype=jnp.float32)
    # Deterministic "parameters" (synthetic init, no checkpoint).
    w = jax.random.normal(k_w, (d_g_feats, d_bond_feats), dtype=jnp.float32) * 0.1
    w_t = w.T                                             # [d_bond, d_g]
    bias = jax.random.normal(k_b, (d_g_feats,), dtype=jnp.float32) * 0.1
    virtual_emb = jax.random.normal(k_v, (d_g_feats,), dtype=jnp.float32)
    # Indicators: mix of virtual (-1) and real (0) bonds.
    indicators = jnp.where(
        jax.random.uniform(k_ind, (N,)) < 0.3,
        jnp.int32(VIRTUAL_BOND_FEATURE_PLACEHOLDER),
        jnp.int32(0),
    )

    # Pure-JAX reference.
    ref = edge_feats @ w_t + bias
    ref = jnp.where(
        (indicators == VIRTUAL_BOND_FEATURE_PLACEHOLDER)[:, None],
        virtual_emb[None, :],
        ref,
    )

    # f32 path (exact check; also exercises a partial-free 2-step grid).
    out = bond_embedding(edge_feats, indicators, w_t, bias, virtual_emb)
    out = jax.block_until_ready(out)
    assert out.shape == (N, d_g_feats)
    assert out.dtype == edge_feats.dtype
    assert jnp.allclose(out, ref, atol=1e-5, rtol=1e-5), "f32 mismatch vs reference"

    # bf16-streaming / bf16-output path (bandwidth-optimized; looser tolerance).
    out_bf16 = bond_embedding(edge_feats, indicators, w_t, bias, virtual_emb,
                              stream_dtype=jnp.bfloat16, out_dtype=jnp.bfloat16)
    out_bf16 = jax.block_until_ready(out_bf16)
    assert out_bf16.shape == (N, d_g_feats)
    assert jnp.allclose(out_bf16.astype(jnp.float32), ref,
                        atol=5e-2, rtol=5e-2), "bf16 mismatch vs reference"

    # Odd-N case to exercise the cdiv boundary block (masked partial writes).
    N_odd = 13
    out_odd = bond_embedding(edge_feats[:N_odd], indicators[:N_odd],
                             w_t, bias, virtual_emb)
    out_odd = jax.block_until_ready(out_odd)
    assert out_odd.shape == (N_odd, d_g_feats)
    assert jnp.allclose(out_odd, ref[:N_odd], atol=1e-5, rtol=1e-5), \
        "odd-N mismatch vs reference"

    print("KERNEL_OK")
</pallas_src>

<mosaic_0001>
module attributes {stable_mosaic.version = 11 : i64} {
  func.func @bond_embedding_kernel(%arg0: i32, %arg1: memref<8x8xf32, #tpu.memory_space<vmem>>, %arg2: memref<8x1xi32, #tpu.memory_space<vmem>>, %arg3: memref<8x32xf32, #tpu.memory_space<vmem>>, %arg4: memref<1x32xf32, #tpu.memory_space<vmem>>, %arg5: memref<1x32xf32, #tpu.memory_space<vmem>>, %arg6: memref<8x32xf32, #tpu.memory_space<vmem>>) attributes {dimension_semantics = [#tpu.dimension_semantics<parallel>], iteration_bounds = array<i64: 2>, scalar_prefetch = 0 : i64, scratch_operands = 0 : i64, tpu.core_type = #tpu.core_type<tc>, window_params = [{transform_indices = @transform_0, window_bounds = array<i64: 8, 8>}, {transform_indices = @transform_1, window_bounds = array<i64: 8, 1>}, {pipeline_mode = #tpu.pipeline_mode<synchronous>, transform_indices = @transform_2, window_bounds = array<i64: 8, 32>}, {pipeline_mode = #tpu.pipeline_mode<synchronous>, transform_indices = @transform_3, window_bounds = array<i64: 1, 32>}, {pipeline_mode = #tpu.pipeline_mode<synchronous>, transform_indices = @transform_4, window_bounds = array<i64: 1, 32>}, {transform_indices = @transform_5, window_bounds = array<i64: 8, 32>}]} {
    %c0 = arith.constant 0 : index
    %c0_0 = arith.constant 0 : index
    %0 = vector.load %arg1[%c0, %c0_0] : memref<8x8xf32, #tpu.memory_space<vmem>>, vector<8x8xf32>
    %c0_1 = arith.constant 0 : index
    %c0_2 = arith.constant 0 : index
    %1 = vector.load %arg3[%c0_1, %c0_2] : memref<8x32xf32, #tpu.memory_space<vmem>>, vector<8x32xf32>
    %cst = arith.constant dense<0.000000e+00> : vector<8x32xf32>
    %2 = tpu.matmul %0, %1, %cst {dimension_numbers = #tpu.dot_dimension_numbers<[1], [0], [0], [1], [0, 0, 1, 1], [], []>} : vector<8x8xf32>, vector<8x32xf32>, vector<8x32xf32> -> vector<8x32xf32>
    %c0_3 = arith.constant 0 : index
    %c0_4 = arith.constant 0 : index
    %3 = vector.load %arg4[%c0_3, %c0_4] : memref<1x32xf32, #tpu.memory_space<vmem>>, vector<1x32xf32>
    %4 = vector.broadcast %3 : vector<1x32xf32> to vector<8x32xf32>
    %5 = arith.addf %2, %4 : vector<8x32xf32>
    %c0_5 = arith.constant 0 : index
    %c0_6 = arith.constant 0 : index
    %6 = vector.load %arg2[%c0_5, %c0_6] : memref<8x1xi32, #tpu.memory_space<vmem>>, vector<8x1xi32>
    %c-1_i32 = arith.constant -1 : i32
    %7 = vector.broadcast %c-1_i32 : i32 to vector<8x1xi32>
    %8 = arith.cmpi eq, %6, %7 : vector<8x1xi32>
    %c0_7 = arith.constant 0 : index
    %c0_8 = arith.constant 0 : index
    %9 = vector.load %arg5[%c0_7, %c0_8] : memref<1x32xf32, #tpu.memory_space<vmem>>, vector<1x32xf32>
    %10 = vector.shape_cast %8 : vector<8x1xi1> to vector<8x1xi1>
    %11 = vector.broadcast %10 : vector<8x1xi1> to vector<8x32xi1>
    %12 = vector.shape_cast %9 : vector<1x32xf32> to vector<1x32xf32>
    %13 = vector.broadcast %12 : vector<1x32xf32> to vector<8x32xf32>
    %14 = arith.select %11, %13, %5 : vector<8x32xi1>, vector<8x32xf32>
    %c0_9 = arith.constant 0 : index
    %c0_10 = arith.constant 0 : index
    %15 = vector.load %arg6[%c0_9, %c0_10] : memref<8x32xf32, #tpu.memory_space<vmem>>, vector<8x32xf32>
    tpu.vector_store %arg6[%c0_9, %c0_10], %14 {strides = array<i32>} : memref<8x32xf32, #tpu.memory_space<vmem>>, vector<8x32xf32>,
    return
  }
  func.func @transform_0(%arg0: i32) -> (i32, i32) {
    %c0_i32 = arith.constant 0 : i32
    %c0_i32_0 = arith.constant 0 : i32
    return %arg0, %c0_i32 : i32, i32
  }
  func.func @transform_1(%arg0: i32) -> (i32, i32) {
    %c0_i32 = arith.constant 0 : i32
    %c0_i32_0 = arith.constant 0 : i32
    return %arg0, %c0_i32 : i32, i32
  }
  func.func @transform_2(%arg0: i32) -> (i32, i32) {
    %c0_i32 = arith.constant 0 : i32
    %c0_i32_0 = arith.constant 0 : i32
    %c0_i32_1 = arith.constant 0 : i32
    return %c0_i32, %c0_i32_0 : i32, i32
  }
  func.func @transform_3(%arg0: i32) -> (i32, i32) {
    %c0_i32 = arith.constant 0 : i32
    %c0_i32_0 = arith.constant 0 : i32
    %c0_i32_1 = arith.constant 0 : i32
    return %c0_i32, %c0_i32_0 : i32, i32
  }
  func.func @transform_4(%arg0: i32) -> (i32, i32) {
    %c0_i32 = arith.constant 0 : i32
    %c0_i32_0 = arith.constant 0 : i32
    %c0_i32_1 = arith.constant 0 : i32
    return %c0_i32, %c0_i32_0 : i32, i32
  }
  func.func @transform_5(%arg0: i32) -> (i32, i32) {
    %c0_i32 = arith.constant 0 : i32
    %c0_i32_0 = arith.constant 0 : i32
    return %arg0, %c0_i32 : i32, i32
  }
}

</mosaic_0001>

<llo_original>
// kernel: tpu_custom_call.1
$region0: #{tpu_custom_call.1}
  #allocation0 [shape = 'u32[]', space=smem, size = 0x4, offset = 0x4, fixed_abs, tag = 'smem constant byte address 0x4 - core index']
  #allocation1 [shape = 'u32[72,128]{1,0:T(1,128)}', space=vmem, size = 0x9000, scoped, tag = 'internal scratch']
  %s0 = inlined_call_operand.vmem [shape: f32[16,8], index: 0, kind: input, shape index: {}]
  %s1 = inlined_call_operand.vmem [shape: s32[16,1], index: 1, kind: input, shape index: {}]
  %s2 = inlined_call_operand.vmem [shape: f32[8,32], index: 2, kind: input, shape index: {}]
  %s3 = inlined_call_operand.vmem [shape: f32[1,32], index: 3, kind: input, shape index: {}]
  %s4 = inlined_call_operand.vmem [shape: f32[1,32], index: 4, kind: input, shape index: {}]
  %s5 = inlined_call_operand.hbm [shape: f32[16,32], index: 5, kind: output, shape index: {}]
  %s6 = sld [smem:[#allocation0]]
  $region53: #{tpu_custom_call.1} parent=0
    _
  %s8 = ssub.s32 1, %s6
  %s9 = scalar_select 0, %s8, %s6
  $region1: #{tpu_custom_call.1} parent=0
    #allocation2 [shape = 'u8[8192]{0}', space=vmem, size = 0x2000, scoped, tag = 'output window, operand 0']
    #allocation3 [shape = 's32[2]{0}', space=sflag, size = 0x8, scoped, tag = 'scoped memory for tpu_custom_call.1']
    %10 = vsyncpa [#allocation3], 0
    %s11 = scalar_lea.sflag [#allocation3], 1
    %12 = vsyncpa %s11, 0
    loop: start=0, step=1, limit=4
    $region2: #{tpu_custom_call.1} parent=1 // loop_pre_header
      _
    $region3: #{tpu_custom_call.1} parent=1 // loop_header
      %s14 = sphi 0, %s18
      %p15 = scmp.ge.s32.totalorder %s14, 4
      %s24 = sphi 0, %s26
      %s27 = sphi 0, %s24
      %s28 = sphi 0, %s27
      %s44 = sphi 0, %s28
      %s50 = sphi 0, %s52
      %s53 = sphi 0, %s50
      %s54 = sphi 0, %s53
      %s70 = sphi 0, %s54
      %s74 = sphi 0, %s74
      %s76 = sphi 0, %s74
      %s77 = sphi 0, %s76
      %s91 = sphi 0, %s77
      %s95 = sphi 0, %s95
      %s97 = sphi 0, %s95
      %s98 = sphi 0, %s97
      %s112 = sphi 0, %s98
      %s116 = sphi 0, %s116
      %s118 = sphi 0, %s116
      %s119 = sphi 0, %s118
      %s133 = sphi 0, %s119
      %s139 = sphi 0, %s141
      %s142 = sphi 0, %s139
      %s143 = sphi 0, %s142
      %s159 = sphi 0, %s143
    $region4: #{tpu_custom_call.1} parent=1 // loop_header_branch
      %17 = sbr.rel (%p15) target = $region8
    $region5: #{tpu_custom_call.1} parent=1 // loop_body
      %s19 = ssub.s32 %s14, 1
      %s20 = ssub.s32 %s14, 2
      %s21 = sadd.s32 %s14, 1
      %s22 = ssub.s32 %s14, %s21
      %p23 = scmp.eq.s32.totalorder %s22, 0
      %s25 = sadd.s32 %s24, 1
      %s26 = scalar_select %p23, %s24, %s25
      %p29 = pneg %p23
      %p30 = scmp.eq.s32.totalorder %s14, 1
      %p31 = por %p29, %p30
      %p32 = scmp.ne.s32.totalorder %s24, %s27
      %p33 = scmp.eq.s32.totalorder %s14, 0
      %p34 = por %p32, %p33
      %p35 = scmp.ne.s32.totalorder %s24, %s27
      %p36 = scmp.eq.s32.totalorder %s19, 1
      %p37 = por %p35, %p36
      %p38 = scmp.ne.s32.totalorder %s27, %s28
      %p39 = scmp.eq.s32.totalorder %s19, 0
      %p40 = por %p38, %p39
      %p41 = scmp.ne.s32.totalorder %s27, %s28
      %p42 = scmp.eq.s32.totalorder %s20, 1
      %p43 = por %p41, %p42
      %p45 = scmp.ne.s32.totalorder %s28, %s44
      %p46 = scmp.eq.s32.totalorder %s20, 0
      %p47 = por %p45, %p46
      %s48 = ssub.s32 %s14, %s21
      %p49 = scmp.eq.s32.totalorder %s48, 0
      %s51 = sadd.s32 %s50, 1
      %s52 = scalar_select %p49, %s50, %s51
      %p55 = pneg %p49
      %p56 = scmp.eq.s32.totalorder %s14, 1
      %p57 = por %p55, %p56
      %p58 = scmp.ne.s32.totalorder %s50, %s53
      %p59 = scmp.eq.s32.totalorder %s14, 0
      %p60 = por %p58, %p59
      %p61 = scmp.ne.s32.totalorder %s50, %s53
      %p62 = scmp.eq.s32.totalorder %s19, 1
      %p63 = por %p61, %p62
      %p64 = scmp.ne.s32.totalorder %s53, %s54
      %p65 = scmp.eq.s32.totalorder %s19, 0
      %p66 = por %p64, %p65
      %p67 = scmp.ne.s32.totalorder %s53, %s54
      %p68 = scmp.eq.s32.totalorder %s20, 1
      %p69 = por %p67, %p68
      %p71 = scmp.ne.s32.totalorder %s54, %s70
      %p72 = scmp.eq.s32.totalorder %s20, 0
      %p73 = por %p71, %p72
      %s75 = sadd.s32 %s74, 1
      %p78 = scmp.eq.s32.totalorder %s14, 1
      %p79 = scmp.ne.s32.totalorder %s74, %s76
      %p80 = scmp.eq.s32.totalorder %s14, 0
      %p81 = por %p79, %p80
      %p82 = scmp.ne.s32.totalorder %s74, %s76
      %p83 = scmp.eq.s32.totalorder %s19, 1
      %p84 = por %p82, %p83
      %p85 = scmp.ne.s32.totalorder %s76, %s77
      %p86 = scmp.eq.s32.totalorder %s19, 0
      %p87 = por %p85, %p86
      %p88 = scmp.ne.s32.totalorder %s76, %s77
      %p89 = scmp.eq.s32.totalorder %s20, 1
      %p90 = por %p88, %p89
      %p92 = scmp.ne.s32.totalorder %s77, %s91
      %p93 = scmp.eq.s32.totalorder %s20, 0
      %p94 = por %p92, %p93
      %s96 = sadd.s32 %s95, 1
      %p99 = scmp.eq.s32.totalorder %s14, 1
      %p100 = scmp.ne.s32.totalorder %s95, %s97
      %p101 = scmp.eq.s32.totalorder %s14, 0
      %p102 = por %p100, %p101
      %p103 = scmp.ne.s32.totalorder %s95, %s97
      %p104 = scmp.eq.s32.totalorder %s19, 1
      %p105 = por %p103, %p104
      %p106 = scmp.ne.s32.totalorder %s97, %s98
      %p107 = scmp.eq.s32.totalorder %s19, 0
      %p108 = por %p106, %p107
      %p109 = scmp.ne.s32.totalorder %s97, %s98
      %p110 = scmp.eq.s32.totalorder %s20, 1
      %p111 = por %p109, %p110
      %p113 = scmp.ne.s32.totalorder %s98, %s112
      %p114 = scmp.eq.s32.totalorder %s20, 0
      %p115 = por %p113, %p114
      %s117 = sadd.s32 %s116, 1
      %p120 = scmp.eq.s32.totalorder %s14, 1
      %p121 = scmp.ne.s32.totalorder %s116, %s118
      %p122 = scmp.eq.s32.totalorder %s14, 0
      %p123 = por %p121, %p122
      %p124 = scmp.ne.s32.totalorder %s116, %s118
      %p125 = scmp.eq.s32.totalorder %s19, 1
      %p126 = por %p124, %p125
      %p127 = scmp.ne.s32.totalorder %s118, %s119
      %p128 = scmp.eq.s32.totalorder %s19, 0
      %p129 = por %p127, %p128
      %p130 = scmp.ne.s32.totalorder %s118, %s119
      %p131 = scmp.eq.s32.totalorder %s20, 1
      %p132 = por %p130, %p131
      %p134 = scmp.ne.s32.totalorder %s119, %s133
      %p135 = scmp.eq.s32.totalorder %s20, 0
      %p136 = por %p134, %p135
      %s137 = ssub.s32 %s14, %s21
      %p138 = scmp.eq.s32.totalorder %s137, 0
      %s140 = sadd.s32 %s139, 1
      %s141 = scalar_select %p138, %s139, %s140
      %p144 = pneg %p138
      %p145 = scmp.eq.s32.totalorder %s14, 1
      %p146 = por %p144, %p145
      %p147 = scmp.ne.s32.totalorder %s139, %s142
      %p148 = scmp.eq.s32.totalorder %s14, 0
      %p149 = por %p147, %p148
      %p150 = scmp.ne.s32.totalorder %s139, %s142
      %p151 = scmp.eq.s32.totalorder %s19, 1
      %p152 = por %p150, %p151
      %p153 = scmp.ne.s32.totalorder %s142, %s143
      %p154 = scmp.eq.s32.totalorder %s19, 0
      %p155 = por %p153, %p154
      %p156 = scmp.ne.s32.totalorder %s142, %s143
      %p157 = scmp.eq.s32.totalorder %s20, 1
      %p158 = por %p156, %p157
      %p160 = scmp.ne.s32.totalorder %s143, %s159
      %p161 = scmp.eq.s32.totalorder %s20, 0
      %p162 = por %p160, %p161
      %p163 = scmp.le.s32.totalorder 1, %s14
      %p164 = scmp.lt.s32.totalorder %s14, 3
      %p165 = pnand %p163, %p164
      %p166 = pneg %p165
      // Predicated region
      $region9: #{tpu_custom_call.1} parent=5 // pred_check
        _
      $region10: #{tpu_custom_call.1} parent=5 // pred_check_branch
        %168 = sbr.rel (%p165) target = $region12
      $region11: #{tpu_custom_call.1} parent=5 // pred_region
        %s169 = ssub.s32 %s14, 1
        // Predicated region
        $region13: #{tpu_custom_call.1} parent=11 // pred_check
          %p170 = pneg %p87
        $region14: #{tpu_custom_call.1} parent=11 // pred_check_branch
          %172 = sbr.rel (%p170) target = $region16
        $region15: #{tpu_custom_call.1} parent=11 // pred_region
          _
        $region16: #{tpu_custom_call.1} parent=11 // pred_fallthru
          _
        // Predicated region
        $region17: #{tpu_custom_call.1} parent=11 // pred_check
          %p173 = pneg %p108
        $region18: #{tpu_custom_call.1} parent=11 // pred_check_branch
          %175 = sbr.rel (%p173) target = $region20
        $region19: #{tpu_custom_call.1} parent=11 // pred_region
          _
        $region20: #{tpu_custom_call.1} parent=11 // pred_fallthru
          _
        // Predicated region
        $region21: #{tpu_custom_call.1} parent=11 // pred_check
          %p176 = pneg %p129
        $region22: #{tpu_custom_call.1} parent=11 // pred_check_branch
          %178 = sbr.rel (%p176) target = $region24
        $region23: #{tpu_custom_call.1} parent=11 // pred_region
          _
        $region24: #{tpu_custom_call.1} parent=11 // pred_fallthru
          _
      $region12: #{tpu_custom_call.1} parent=5 // pred_fallthru
        _
      %p179 = scmp.lt.s32.totalorder %s14, 2
      // Predicated region
      $region25: #{tpu_custom_call.1} parent=5 // pred_check
        %p180 = pneg %p179
      $region26: #{tpu_custom_call.1} parent=5 // pred_check_branch
        %182 = sbr.rel (%p180) target = $region28
      $region27: #{tpu_custom_call.1} parent=5 // pred_region
        // Predicated region
        $region29: #{tpu_custom_call.1} parent=27 // pred_check
          %p183 = pneg %p34
        $region30: #{tpu_custom_call.1} parent=27 // pred_check_branch
          %185 = sbr.rel (%p183) target = $region32
        $region31: #{tpu_custom_call.1} parent=27 // pred_region
          %p186 = scmp.lt.s32.totalorder %s14, 1
          %s187 = scalar_select %p186, %s14, 1
          %s188 = smul.addr %s187, 8
          %s189 = scalar_lea.vmem %s0, %s188
        $region32: #{tpu_custom_call.1} parent=27 // pred_fallthru
          _
        // Predicated region
        $region33: #{tpu_custom_call.1} parent=27 // pred_check
          %p190 = pneg %p60
        $region34: #{tpu_custom_call.1} parent=27 // pred_check_branch
          %192 = sbr.rel (%p190) target = $region36
        $region35: #{tpu_custom_call.1} parent=27 // pred_region
          %p193 = scmp.lt.s32.totalorder %s14, 1
          %s194 = scalar_select %p193, %s14, 1
          %s195 = smul.addr %s194, 8
          %s196 = scalar_lea.vmem %s1, %s195
        $region36: #{tpu_custom_call.1} parent=27 // pred_fallthru
          _
      $region28: #{tpu_custom_call.1} parent=5 // pred_fallthru
        _
      %p197 = scmp.le.s32.totalorder 1, %s14
      %p198 = scmp.lt.s32.totalorder %s14, 3
      %p199 = pnand %p197, %p198
      %p200 = pneg %p199
      // Predicated region
      $region37: #{tpu_custom_call.1} parent=5 // pred_check
        _
      $region38: #{tpu_custom_call.1} parent=5 // pred_check_branch
        %202 = sbr.rel (%p199) target = $region40
      $region39: #{tpu_custom_call.1} parent=5 // pred_region
        %s203 = ssub.s32 %s14, 1
        %p204 = scmp.lt.s32.totalorder %s19, 1
        %s205 = scalar_select %p204, %s19, 1
        %s206 = smul.addr %s205, 8
        %s207 = scalar_lea.vmem %s0, %s206
        %p208 = pneg %p40
        %p209 = pneg %p37
        %p210 = scmp.lt.s32.totalorder %s19, 1
        %s211 = scalar_select %p210, %s19, 1
        %s212 = smul.addr %s211, 8
        %s213 = scalar_lea.vmem %s1, %s212
        %p214 = pneg %p66
        %p215 = pneg %p63
        %p216 = pneg %p87
        %p217 = pneg %p84
        %p218 = pneg %p108
        %p219 = pneg %p105
        %p220 = pneg %p129
        %p221 = pneg %p126
        %p222 = pneg %p155
        %p223 = pneg %p152
        %s224 = sand.u32 %s142, 1
        %s225 = scalar_lea.sflag [#allocation3], %s224
        %s226 = sand.u32 %s142, 1
        %s227 = smul.addr %s226, 8
        %s228 = scalar_lea.vmem [#allocation2], %s227
        %p229 = scmp.lt.s32.totalorder %s19, 1
        %s230 = scalar_select %p229, %s19, 1
        %s231 = smul.addr %s230, 8
        %s232 = scalar_lea.vmem %s0, %s231
        %p233 = scmp.lt.s32.totalorder %s19, 1
        %s234 = scalar_select %p233, %s19, 1
        %s235 = smul.addr %s234, 8
        %s236 = scalar_lea.vmem %s1, %s235
        %v237 = vld [vmem:[%s232] sm:$0xff]
        %v238 = vld [vmem:[%s2] sm:$0xff]
        %v239 = vld [vmem:[%s3] sm:$0x1]
        %v241 = vperm.slane %v239, 0
        %vm243 = vcmask 64512
        %v245 = vsel %vm243, %v237, 0
        %247 = vmatpush.msra.mxu0 0.0
        %248 = vmatpush.msra.mxu0 0.0
        %249 = vmatpush.msra.mxu0 0.0
        %250 = vmatpush.msra.mxu0 0.0
        %251 = vmatpush.msra.mxu0 0.0
        %252 = vmatpush.msra.mxu0 0.0
        %253 = vmatpush.msra.mxu0 0.0
        %254 = vmatpush.msra.mxu0 0.0
        %255 = vmatpush.msra.mxu0 0.0
        %256 = vmatpush.msra.mxu0 0.0
        %257 = vmatpush.msra.mxu0 0.0
        %258 = vmatpush.msra.mxu0 0.0
        %259 = vmatpush.msra.mxu0 0.0
        %260 = vmatpush.msra.mxu0 0.0
        %261 = vmatpush.msra.mxu0 0.0
        %262 = vmatpush.msra.mxu0 %v238
        %263 = vmatmul.f32.gmra.mxu0 %v245
        %v264 = vpop.f32.mrf.mxu0
        %v265 = vadd.f32 %v241, %v264
        %266 = vdwg.mxu0
        %v267 = vld [vmem:[%s236] sm:$0xff]
        %vm268 = vcmp.eq.s32.totalorder %v267, 4294967295
        %v269 = vld [vmem:[%s4] sm:$0x1]
        %v270 = vsel %vm268, 1, 0
        %271 = vset.pattern.permute.xlu0 0
        %272 = vperm.xlu0 %271, %v270
        %v273 = vpop.permute.xlu0 %272
        %vm274 = vcmp.eq.s32.totalorder %v273, 1
        %v276 = vperm.slane %v269, 0
        %v278 = vsel %vm274, %v276, %v265
        %vm279 = vcmask 261120
        %280 = vst.msk [vmem:[%s228] sm:$0xff] %vm279, %v278
        %s281 = sand.u32 %s142, 1
        %s282 = scalar_lea.sflag [#allocation3], %s281
        %s283 = sand.u32 %s142, 1
        %s284 = smul.addr %s283, 8
        %s285 = scalar_lea.vmem [#allocation2], %s284
        // Predicated region
        $region41: #{tpu_custom_call.1} parent=39 // pred_check
          %p286 = pneg %p152
        $region42: #{tpu_custom_call.1} parent=39 // pred_check_branch
          %288 = sbr.rel (%p286) target = $region44
        $region43: #{tpu_custom_call.1} parent=39 // pred_region
          %290 = vsyncadd %s282, 0
          %s291 = smul.addr %s19, 8
          %s292 = scalar_lea.hbm %s5, %s291
          %s294 = sshll.u32 %s285, 4
          %s295 = int_to_ptr.vmem [resolvable:$true] %s294
          %s296 = sshll.u32 %s292, 4
          %s297 = int_to_ptr.hbm [resolvable:$true] %s296
          %299 = dma.vmem_to_hbm [thread:$0]  %s295, 128, %s297, %s282
        $region44: #{tpu_custom_call.1} parent=39 // pred_fallthru
          _
      $region40: #{tpu_custom_call.1} parent=5 // pred_fallthru
        _
      %p300 = scmp.le.s32.totalorder 2, %s14
      // Predicated region
      $region45: #{tpu_custom_call.1} parent=5 // pred_check
        %p301 = pneg %p300
      $region46: #{tpu_custom_call.1} parent=5 // pred_check_branch
        %303 = sbr.rel (%p301) target = $region48
      $region47: #{tpu_custom_call.1} parent=5 // pred_region
        %s304 = ssub.s32 %s14, 2
        // Predicated region
        $region49: #{tpu_custom_call.1} parent=47 // pred_check
          %p305 = pneg %p158
        $region50: #{tpu_custom_call.1} parent=47 // pred_check_branch
          %307 = sbr.rel (%p305) target = $region52
        $region51: #{tpu_custom_call.1} parent=47 // pred_region
          %s308 = sand.u32 %s143, 1
          %s309 = scalar_lea.sflag [#allocation3], %s308
          %s310 = sand.u32 %s143, 1
          %s311 = smul.addr %s310, 8
          %s312 = scalar_lea.vmem [#allocation2], %s311
          %314 = dma.done %s309, 128
        $region52: #{tpu_custom_call.1} parent=47 // pred_fallthru
          _
      $region48: #{tpu_custom_call.1} parent=5 // pred_fallthru
        _
    $region6: #{tpu_custom_call.1} parent=1 // loop_footer
      %s18 = sadd.s32 1, %s14
    $region7: #{tpu_custom_call.1} parent=1 // loop_footer_branch
      %13 = sbr.rel target = $region3
    $region8: #{tpu_custom_call.1} parent=1 // loop_exit
      _
    %315 = vsyncpa [#allocation3], 1
    %s316 = scalar_lea.sflag [#allocation3], 1
    %317 = vsyncpa %s316, 1

</llo_original>
